<compile_context>
chip_gen: v5e
topology: v5e:2x2
jax: 0.10.0
libtpu: 0.0.40
codegen_flags: <defaults>
</compile_context>

<pallas_src>
import functools
import math

import jax
import jax.numpy as jnp
from jax.experimental import pallas as pl
from jax.experimental.pallas import tpu as pltpu


def _round_up(x, m):
    return ((x + m - 1) // m) * m


def _vmem_capacity_bytes(default=64 * 1024 * 1024):
    """Per-core VMEM capacity; conservative (v7x-sized) fallback if the query fails."""
    try:
        info = pltpu.get_tpu_info()
        cap = getattr(info, "vmem_capacity_bytes", None)
        if cap:
            return int(cap)
    except Exception:
        pass
    return default


# ----------------------------------------------------------------------------
# Pallas kernel 1: gate logits (bf16 MXU, f32 acc) + f32 row softmax, emitting only
# routing statistics (argmax expert, top prob, per-tile gate column sums) instead of
# the lane-padded full gate matrix.
# ----------------------------------------------------------------------------
def _gate_kernel(x_ref, wg_ref, idx_ref, topp_ref, colsum_ref, *, n_experts, n_tokens):
    ts = x_ref.shape[0]
    ep = wg_ref.shape[1]

    logits = jnp.dot(x_ref[...], wg_ref[...], preferred_element_type=jnp.float32)
    col = jax.lax.broadcasted_iota(jnp.int32, (ts, ep), 1)
    logits = jnp.where(col < n_experts, logits, -1e30)          # mask padded expert lanes
    m = jnp.max(logits, axis=-1, keepdims=True)
    p = jnp.exp(logits - m)
    gates = p / jnp.sum(p, axis=-1, keepdims=True)              # (ts, ep), padded cols = 0

    top = jnp.max(gates, axis=-1, keepdims=True)                # (ts, 1)
    first_max = jnp.min(jnp.where(gates == top, col, ep), axis=-1, keepdims=True)
    idx_ref[...] = first_max.astype(jnp.int32)
    topp_ref[...] = top

    # Per-tile column sums (padded tail rows masked out) for the l_aux mean.
    row = pl.program_id(0) * ts + jax.lax.broadcasted_iota(jnp.int32, (ts, 1), 0)
    gates_valid = jnp.where(row < n_tokens, gates, 0.0)
    colsum_ref[0] = jnp.sum(gates_valid, axis=0, keepdims=True)


def compute_gate_stats(x_flat, wg, *, block_s=256):
    S, M = x_flat.shape
    E = wg.shape[1]
    ep = _round_up(max(E, 128), 128)                 # lane-dense matmul width
    block_s = _round_up(block_s, 8)
    ts = min(block_s, _round_up(S, 8))
    S_pad = _round_up(S, ts)
    n_t = S_pad // ts

    x_bf = x_flat.astype(jnp.bfloat16)
    if S_pad != S:
        x_bf = jnp.pad(x_bf, ((0, S_pad - S), (0, 0)))
    wg_pad = jnp.zeros((M, ep), jnp.bfloat16).at[:, :E].set(wg.astype(jnp.bfloat16))

    kernel = functools.partial(_gate_kernel, n_experts=E, n_tokens=S)
    idx, topp, colsum = pl.pallas_call(
        kernel,
        out_shape=(jax.ShapeDtypeStruct((S_pad, 1), jnp.int32),
                   jax.ShapeDtypeStruct((S_pad, 1), jnp.float32),
                   jax.ShapeDtypeStruct((n_t, 1, ep), jnp.float32)),
        grid=(n_t,),
        in_specs=[pl.BlockSpec((ts, M), lambda i: (i, 0)),
                  pl.BlockSpec((M, ep), lambda i: (0, 0))],
        out_specs=(pl.BlockSpec((ts, 1), lambda i: (i, 0)),
                   pl.BlockSpec((ts, 1), lambda i: (i, 0)),
                   pl.BlockSpec((1, 1, ep), lambda i: (i, 0, 0))),
        compiler_params=pltpu.CompilerParams(dimension_semantics=("parallel",)),
    )(x_bf, wg_pad)

    expert_idx = idx[:S, 0]
    top_prob = topp[:S, 0]
    me = jnp.sum(colsum[:, 0, :E], axis=0) / S       # mean gate prob per expert
    return expert_idx, top_prob, me


# ----------------------------------------------------------------------------
# Top-1 gating bookkeeping (capacity / slot assignment / l_aux) — pure-JAX glue.
#   dispatch_idx[e*C_pad + c] = source token for slot c of expert e (sentinel 0 if empty)
#   flat_pos[s]               = slot a kept token reads its expert output from
#   keep_w[s]                 = gate prob of the chosen expert (0 if the token is dropped)
# ----------------------------------------------------------------------------
def top1_routing(expert_idx, top_prob, me, *, num_tokens, num_experts, capacity, c_pad):
    S, E = num_tokens, num_experts
    mask1 = jax.nn.one_hot(expert_idx, E, dtype=jnp.int32)              # (S, E)
    exp_counts = jnp.sum(mask1, axis=0).astype(jnp.int32)               # before capacity drop

    # load-balancing aux loss (computed before capacity truncation, as in DeepSpeed)
    ce = jnp.mean(mask1.astype(jnp.float32), axis=0)
    l_aux = jnp.sum(me * ce) * E

    # position of each token within its expert; with use_rts=False the first
    # `capacity` tokens per expert are kept.
    pos_in_expert = jnp.take_along_axis(jnp.cumsum(mask1, axis=0) - 1,
                                        expert_idx[:, None], axis=1)[:, 0]
    keep = pos_in_expert < capacity
    keep_w = jnp.where(keep, top_prob, 0.0).astype(jnp.float32)

    flat_pos = (expert_idx * c_pad + pos_in_expert).astype(jnp.int32)
    flat_pos_safe = jnp.where(keep, flat_pos, 0).astype(jnp.int32)       # weight is 0 anyway
    scatter_pos = jnp.where(keep, flat_pos, E * c_pad)                   # OOB -> dropped
    dispatch_idx = jnp.zeros((E * c_pad,), jnp.int32).at[scatter_pos].set(
        jnp.arange(S, dtype=jnp.int32), mode="drop")
    return l_aux, exp_counts, dispatch_idx, flat_pos_safe, keep_w


# ----------------------------------------------------------------------------
# Pallas kernel 2: per-expert MLP.
#   grid = (E, F//tF); experts "parallel" (megacore), F tiled as an accumulation axis.
#   f == 0     : init the resident f32 accumulator with b2.
#   every f    : acc += relu(xd @ W1[:, f-chunk] + b1[f-chunk]) @ W2[f-chunk, :]
#   f == last  : store accumulator to the bf16 output block.
# All MXU inputs are bf16; accumulation is f32 in a VMEM scratch.
# ----------------------------------------------------------------------------
def _expert_kernel(xd_ref, w1_ref, b1_ref, w2_ref, b2_ref, eo_ref, acc_ref):
    f = pl.program_id(1)

    @pl.when(f == 0)
    def _init():
        # bias of the second linear, added exactly once per expert
        acc_ref[...] = jnp.broadcast_to(b2_ref[0], acc_ref.shape)

    h = jnp.dot(xd_ref[0], w1_ref[0], preferred_element_type=jnp.float32) + b1_ref[0]
    h = jnp.maximum(h, 0.0).astype(jnp.bfloat16)                          # (c_pad, tF)
    acc_ref[...] += jnp.dot(h, w2_ref[0], preferred_element_type=jnp.float32)

    @pl.when(f == pl.num_programs(1) - 1)
    def _finalize():
        eo_ref[0] = acc_ref[...].astype(eo_ref.dtype)


def _pick_block_f(M, F, c_pad, budget_bytes):
    """Largest F tile (multiple of 128 dividing F, or F itself) whose working set fits."""
    def vmem_cost(tf):
        wts = 2 * (M * tf + tf * M) * 2          # double-buffered bf16 W1 + W2 tiles
        io = 2 * 2 * (c_pad * M * 2)             # double-buffered bf16 xd block + eo block
        acc = c_pad * M * 4                      # resident f32 accumulator scratch
        tmp = c_pad * tf * 6                     # hidden-activation temporaries
        bias = 2 * (tf + M) * 4
        return wts + io + acc + tmp + bias

    cands = [F] + [t for t in (8192, 4096, 2048, 1024, 512, 256, 128)
                   if t < F and F % t == 0]
    for tf in cands:
        if vmem_cost(tf) <= budget_bytes:
            return tf
    return cands[-1]


def moe_experts(xd, w1, b1, w2, b2, *, block_f=None):
    E, c_pad, M = xd.shape
    F = w1.shape[2]

    vmem_cap = _vmem_capacity_bytes()
    vmem_limit = min(int(vmem_cap * 0.75), 112 * 1024 * 1024)   # per-core budget
    if block_f is not None and block_f > 0 and F % block_f == 0:
        tF = block_f
    else:
        tF = _pick_block_f(M, F, c_pad, int(vmem_cap * 0.5))
    n_f = F // tF

    return pl.pallas_call(
        _expert_kernel,
        out_shape=jax.ShapeDtypeStruct((E, c_pad, M), jnp.bfloat16),
        grid=(E, n_f),
        in_specs=[
            pl.BlockSpec((1, c_pad, M), lambda e, f: (e, 0, 0)),   # dispatched tokens (bf16)
            pl.BlockSpec((1, M, tF), lambda e, f: (e, 0, f)),      # W1 (bf16)
            pl.BlockSpec((1, 1, tF), lambda e, f: (e, 0, f)),      # b1 (f32)
            pl.BlockSpec((1, tF, M), lambda e, f: (e, f, 0)),      # W2 (bf16)
            pl.BlockSpec((1, 1, M), lambda e, f: (e, 0, 0)),       # b2 (f32)
        ],
        out_specs=pl.BlockSpec((1, c_pad, M), lambda e, f: (e, 0, 0)),
        scratch_shapes=[pltpu.VMEM((c_pad, M), jnp.float32)],
        compiler_params=pltpu.CompilerParams(
            dimension_semantics=("parallel", "arbitrary"),
            vmem_limit_bytes=vmem_limit),
        # TODO(synk): if profiling on v5e shows exposed weight DMA at small c_pad, add
        # pipeline_mode=pl.Buffered(3) to the W1/W2 BlockSpecs.
    )(xd,
      w1.astype(jnp.bfloat16), b1.astype(jnp.float32),
      w2.astype(jnp.bfloat16), b2.astype(jnp.float32))


# ----------------------------------------------------------------------------
# Full forward (MOELayer.forward, eval-mode single-device path).
# ----------------------------------------------------------------------------
def moe_forward(hidden_states, params, num_experts, capacity_factor=1.0,
                min_capacity=4, block_f=None, block_s=256, capacity_align=16):
    B, T, M = hidden_states.shape
    x_flat = hidden_states.reshape(-1, M)
    S, E = x_flat.shape[0], num_experts
    capacity = max(math.ceil((S / E) * capacity_factor), min_capacity)
    # Extra capacity-buffer rows carry zero combine weight -> exact. Use
    # capacity_align=128/256 at production sizes for MXU row utilization.
    c_pad = _round_up(capacity, max(capacity_align, 16))

    expert_idx, top_prob, me = compute_gate_stats(x_flat, params["wg"], block_s=block_s)
    l_aux, exp_counts, dispatch_idx, flat_pos, keep_w = top1_routing(
        expert_idx, top_prob, me, num_tokens=S, num_experts=E,
        capacity=capacity, c_pad=c_pad)

    # Dispatch: bf16 row gather done once in XLA; the expert kernel streams the result
    # through a normal BlockSpec so the gather DMA overlaps compute via the pipeline.
    x_bf = x_flat.astype(jnp.bfloat16)
    xd = x_bf[dispatch_idx].reshape(E, c_pad, M)

    eo = moe_experts(xd, params["w1"], params["b1"], params["w2"], params["b2"],
                     block_f=block_f)                                     # (E, c_pad, M) bf16

    # Combine: out[s] = gate[s] * expert_out[slot(s)]; top-1 -> pure gather + scale.
    out_flat = keep_w[:, None] * eo.reshape(E * c_pad, M)[flat_pos]
    out = out_flat.reshape(B, T, M).astype(hidden_states.dtype)
    return out, l_aux, exp_counts


# ----------------------------------------------------------------------------
# Pure-JAX reference with the identical index-based routing and bf16/f32 dtype policy
# (apples-to-apples numerics) for correctness checking.
# ----------------------------------------------------------------------------
def moe_reference(hidden_states, params, num_experts, capacity_factor=1.0,
                  min_capacity=4, capacity_align=16):
    B, T, M = hidden_states.shape
    x_flat = hidden_states.reshape(-1, M)
    S, E = x_flat.shape[0], num_experts
    capacity = max(math.ceil((S / E) * capacity_factor), min_capacity)
    c_pad = _round_up(capacity, max(capacity_align, 16))

    x_bf = x_flat.astype(jnp.bfloat16)
    logits = jnp.dot(x_bf, params["wg"].astype(jnp.bfloat16),
                     preferred_element_type=jnp.float32)
    gates = jax.nn.softmax(logits, axis=-1)
    expert_idx = jnp.argmax(gates, axis=-1).astype(jnp.int32)
    top_prob = jnp.max(gates, axis=-1)
    me = jnp.mean(gates, axis=0)

    l_aux, exp_counts, dispatch_idx, flat_pos, keep_w = top1_routing(
        expert_idx, top_prob, me, num_tokens=S, num_experts=E,
        capacity=capacity, c_pad=c_pad)

    xd = x_bf[dispatch_idx].reshape(E, c_pad, M)
    w1 = params["w1"].astype(jnp.bfloat16)
    w2 = params["w2"].astype(jnp.bfloat16)
    h = jnp.einsum("ecm,emf->ecf", xd, w1,
                   preferred_element_type=jnp.float32) + params["b1"]
    h = jnp.maximum(h, 0.0).astype(jnp.bfloat16)
    eo = (jnp.einsum("ecf,efm->ecm", h, w2,
                     preferred_element_type=jnp.float32) + params["b2"]).astype(jnp.bfloat16)
    out_flat = keep_w[:, None] * eo.reshape(E * c_pad, M)[flat_pos]
    return out_flat.reshape(B, T, M).astype(hidden_states.dtype), l_aux, exp_counts


# TODO(synk): used_token masking, noisy_gate_policy ('Jitter'/'RSample'), Random Token
# Selection (use_rts=True), top-2 gating, residual-MoE branch, expert-parallel
# all-to-all (ep_size>1) and tutel paths are not translated; this implements the
# deterministic single-device eval-mode forward.

if __name__ == "__main__":
    # batch, seq, hidden, num_experts, expert ffn dim (F=256 + block_f=128 exercises F-tiling)
    B, T, M, E, F = 2, 8, 64, 4, 256

    key = jax.random.PRNGKey(0)
    kx, kg, k1, kb1, k2, kb2 = jax.random.split(key, 6)
    hidden_states = jax.random.normal(kx, (B, T, M), dtype=jnp.float32)
    params = {
        "wg": 0.05 * jax.random.normal(kg, (M, E), dtype=jnp.float32),
        "w1": 0.05 * jax.random.normal(k1, (E, M, F), dtype=jnp.float32),
        "b1": 0.05 * jax.random.normal(kb1, (E, 1, F), dtype=jnp.float32),
        "w2": 0.05 * jax.random.normal(k2, (E, F, M), dtype=jnp.float32),
        "b2": 0.05 * jax.random.normal(kb2, (E, 1, M), dtype=jnp.float32),
    }

    out, l_aux, exp_counts = moe_forward(hidden_states, params, num_experts=E, block_f=128)
    jax.block_until_ready((out, l_aux, exp_counts))

    ref_out, ref_l_aux, ref_counts = moe_reference(hidden_states, params, num_experts=E)
    assert out.shape == hidden_states.shape
    assert jnp.allclose(out, ref_out, atol=2e-3, rtol=2e-2), "output mismatch"
    assert jnp.allclose(l_aux, ref_l_aux, atol=1e-5), "l_aux mismatch"
    assert jnp.array_equal(exp_counts, ref_counts), "exp_counts mismatch"

    print("KERNEL_OK")
</pallas_src>

<mosaic_0001>
module attributes {stable_mosaic.version = 11 : i64} {
  func.func @_gate_kernel(%arg0: i32, %arg1: memref<16x64xbf16, #tpu.memory_space<vmem>>, %arg2: memref<64x128xbf16, #tpu.memory_space<vmem>>, %arg3: memref<16x1xi32, #tpu.memory_space<vmem>>, %arg4: memref<16x1xf32, #tpu.memory_space<vmem>>, %arg5: memref<1x1x128xf32, #tpu.memory_space<vmem>>) attributes {dimension_semantics = [#tpu.dimension_semantics<parallel>], iteration_bounds = array<i64: 1>, scalar_prefetch = 0 : i64, scratch_operands = 0 : i64, tpu.core_type = #tpu.core_type<tc>, window_params = [{transform_indices = @transform_0, window_bounds = array<i64: 16, 64>}, {pipeline_mode = #tpu.pipeline_mode<synchronous>, transform_indices = @transform_1, window_bounds = array<i64: 64, 128>}, {transform_indices = @transform_2, window_bounds = array<i64: 16, 1>}, {transform_indices = @transform_3, window_bounds = array<i64: 16, 1>}, {transform_indices = @transform_4, window_bounds = array<i64: 1, 1, 128>}]} {
    %c0 = arith.constant 0 : index
    %c0_0 = arith.constant 0 : index
    %0 = vector.load %arg1[%c0, %c0_0] : memref<16x64xbf16, #tpu.memory_space<vmem>>, vector<16x64xbf16>
    %c0_1 = arith.constant 0 : index
    %c0_2 = arith.constant 0 : index
    %1 = vector.load %arg2[%c0_1, %c0_2] : memref<64x128xbf16, #tpu.memory_space<vmem>>, vector<64x128xbf16>
    %cst = arith.constant dense<0.000000e+00> : vector<16x128xf32>
    %2 = tpu.matmul %0, %1, %cst {dimension_numbers = #tpu.dot_dimension_numbers<[1], [0], [0], [1], [0, 0, 1, 1], [], []>} : vector<16x64xbf16>, vector<64x128xbf16>, vector<16x128xf32> -> vector<16x128xf32>
    %3 = tpu.iota {dimensions = array<i32: 1>} : vector<16x128xi32>
    %c4_i32 = arith.constant 4 : i32
    %4 = vector.broadcast %c4_i32 : i32 to vector<16x128xi32>
    %5 = arith.cmpi slt, %3, %4 : vector<16x128xi32>
    %cst_3 = arith.constant -1.000000e+30 : f32
    %6 = vector.broadcast %cst_3 : f32 to vector<16x128xf32>
    %7 = arith.select %5, %2, %6 : vector<16x128xi1>, vector<16x128xf32>
    %cst_4 = arith.constant dense<0xFF800000> : vector<16xf32>
    %8 = vector.multi_reduction <maximumf>, %7, %cst_4 [1] : vector<16x128xf32> to vector<16xf32>
    %9 = vector.shape_cast %8 : vector<16xf32> to vector<16x1xf32>
    %10 = vector.broadcast %9 : vector<16x1xf32> to vector<16x128xf32>
    %11 = arith.subf %7, %10 : vector<16x128xf32>
    %12 = math.exp %11 : vector<16x128xf32>
    %cst_5 = arith.constant dense<0.000000e+00> : vector<16xf32>
    %13 = vector.multi_reduction <add>, %12, %cst_5 [1] : vector<16x128xf32> to vector<16xf32>
    %14 = vector.shape_cast %13 : vector<16xf32> to vector<16x1xf32>
    %15 = vector.broadcast %14 : vector<16x1xf32> to vector<16x128xf32>
    %16 = arith.divf %12, %15 : vector<16x128xf32>
    %cst_6 = arith.constant dense<0xFF800000> : vector<16xf32>
    %17 = vector.multi_reduction <maximumf>, %16, %cst_6 [1] : vector<16x128xf32> to vector<16xf32>
    %18 = vector.shape_cast %17 : vector<16xf32> to vector<16x1xf32>
    %19 = vector.broadcast %18 : vector<16x1xf32> to vector<16x128xf32>
    %20 = arith.cmpf oeq, %16, %19 : vector<16x128xf32>
    %c128_i32 = arith.constant 128 : i32
    %21 = vector.broadcast %c128_i32 : i32 to vector<16x128xi32>
    %22 = arith.select %20, %3, %21 : vector<16x128xi1>, vector<16x128xi32>
    %cst_7 = arith.constant dense<2147483647> : vector<16xi32>
    %23 = vector.multi_reduction <minsi>, %22, %cst_7 [1] : vector<16x128xi32> to vector<16xi32>
    %24 = vector.shape_cast %23 : vector<16xi32> to vector<16x1xi32>
    %c0_8 = arith.constant 0 : index
    %c0_9 = arith.constant 0 : index
    %25 = vector.load %arg3[%c0_8, %c0_9] : memref<16x1xi32, #tpu.memory_space<vmem>>, vector<16x1xi32>
    tpu.vector_store %arg3[%c0_8, %c0_9], %24 {strides = array<i32>} : memref<16x1xi32, #tpu.memory_space<vmem>>, vector<16x1xi32>,
    %c0_10 = arith.constant 0 : index
    %c0_11 = arith.constant 0 : index
    %26 = vector.load %arg4[%c0_10, %c0_11] : memref<16x1xf32, #tpu.memory_space<vmem>>, vector<16x1xf32>
    tpu.vector_store %arg4[%c0_10, %c0_11], %18 {strides = array<i32>} : memref<16x1xf32, #tpu.memory_space<vmem>>, vector<16x1xf32>,
    %c16_i32 = arith.constant 16 : i32
    %27 = arith.muli %arg0, %c16_i32 : i32
    %28 = tpu.iota {dimensions = array<i32: 0>} : vector<16x1xi32>
    %29 = vector.broadcast %27 : i32 to vector<16x1xi32>
    %30 = arith.addi %29, %28 : vector<16x1xi32>
    %c16_i32_12 = arith.constant 16 : i32
    %31 = vector.broadcast %c16_i32_12 : i32 to vector<16x1xi32>
    %32 = arith.cmpi slt, %30, %31 : vector<16x1xi32>
    %cst_13 = arith.constant 0.000000e+00 : f32
    %33 = vector.shape_cast %32 : vector<16x1xi1> to vector<16x1xi1>
    %34 = vector.broadcast %33 : vector<16x1xi1> to vector<16x128xi1>
    %35 = vector.broadcast %cst_13 : f32 to vector<16x128xf32>
    %36 = arith.select %34, %16, %35 : vector<16x128xi1>, vector<16x128xf32>
    %cst_14 = arith.constant dense<0.000000e+00> : vector<128xf32>
    %37 = vector.multi_reduction <add>, %36, %cst_14 [0] : vector<16x128xf32> to vector<128xf32>
    %38 = vector.shape_cast %37 : vector<128xf32> to vector<1x128xf32>
    %c0_15 = arith.constant 0 : index
    %c0_16 = arith.constant 0 : index
    %c0_17 = arith.constant 0 : index
    %39 = vector.load %arg5[%c0_15, %c0_16, %c0_17] : memref<1x1x128xf32, #tpu.memory_space<vmem>>, vector<1x1x128xf32>
    %40 = vector.shape_cast %39 : vector<1x1x128xf32> to vector<1x128xf32>
    %41 = vector.shape_cast %38 : vector<1x128xf32> to vector<1x1x128xf32>
    tpu.vector_store %arg5[%c0_15, %c0_16, %c0_17], %41 {strides = array<i32>} : memref<1x1x128xf32, #tpu.memory_space<vmem>>, vector<1x1x128xf32>,
    return
  }
  func.func @transform_0(%arg0: i32) -> (i32, i32) {
    %c0_i32 = arith.constant 0 : i32
    %c0_i32_0 = arith.constant 0 : i32
    return %arg0, %c0_i32 : i32, i32
  }
  func.func @transform_1(%arg0: i32) -> (i32, i32) {
    %c0_i32 = arith.constant 0 : i32
    %c0_i32_0 = arith.constant 0 : i32
    %c0_i32_1 = arith.constant 0 : i32
    return %c0_i32, %c0_i32_0 : i32, i32
  }
  func.func @transform_2(%arg0: i32) -> (i32, i32) {
    %c0_i32 = arith.constant 0 : i32
    %c0_i32_0 = arith.constant 0 : i32
    return %arg0, %c0_i32 : i32, i32
  }
  func.func @transform_3(%arg0: i32) -> (i32, i32) {
    %c0_i32 = arith.constant 0 : i32
    %c0_i32_0 = arith.constant 0 : i32
    return %arg0, %c0_i32 : i32, i32
  }
  func.func @transform_4(%arg0: i32) -> (i32, i32, i32) {
    %c0_i32 = arith.constant 0 : i32
    %c0_i32_0 = arith.constant 0 : i32
    %c0_i32_1 = arith.constant 0 : i32
    return %arg0, %c0_i32, %c0_i32_0 : i32, i32, i32
  }
}

</mosaic_0001>

<llo_original>
// kernel: tpu_custom_call.1
$region0: #{tpu_custom_call.1}
  #allocation0 [shape = 'u32[]', space=smem, size = 0x4, offset = 0x4, fixed_abs, tag = 'smem constant byte address 0x4 - core index']
  #allocation1 [shape = 'u32[72,128]{1,0:T(1,128)}', space=vmem, size = 0x9000, scoped, tag = 'internal scratch']
  %s0 = inlined_call_operand.hbm [shape: bf16[16,64], index: 0, kind: input, shape index: {}]
  %s1 = inlined_call_operand.hbm [shape: bf16[64,128], index: 1, kind: input, shape index: {}]
  %s2 = inlined_call_operand.vmem [shape: s32[16,1], index: 2, kind: output, shape index: {0}]
  %s3 = inlined_call_operand.vmem [shape: f32[16,1], index: 3, kind: output, shape index: {1}]
  %s4 = inlined_call_operand.hbm [shape: f32[1,1,128], index: 4, kind: output, shape index: {2}]
  %5 = xla_tuple %s2, %s3, %s4
  %s6 = sld [smem:[#allocation0]]
  $region42: #{tpu_custom_call.1} parent=0
    _
  %s8 = ssub.s32 1, %s6
  %s9 = scalar_select 0, %s8, %s6
  $region1: #{tpu_custom_call.1} parent=0
    #allocation2 [shape = 'u8[4096]{0}', space=vmem, size = 0x1000, scoped, tag = 'input window, operand 0, single buffered']
    #allocation3 [shape = 's32[1]{0}', space=sflag, size = 0x4, scoped, tag = 'scoped memory for tpu_custom_call.1']
    #allocation4 [shape = 's32[1]{0}', space=sflag, size = 0x4, scoped, tag = 'scoped memory for tpu_custom_call.1']
    #allocation5 [shape = 'u8[16384]{0}', space=vmem, size = 0x4000, scoped, tag = 'input window, operand 1, single buffered']
    #allocation6 [shape = 's32[1]{0}', space=sflag, size = 0x4, scoped, tag = 'scoped memory for tpu_custom_call.1']
    #allocation7 [shape = 'u8[512]{0}', space=vmem, size = 0x400, scoped, tag = 'output window, operand 2, single buffered']
    %10 = vsyncpa [#allocation3], 0
    %11 = vsyncpa [#allocation6], 0
    %12 = vsyncpa [#allocation4], 0
    // Predicated region
    $region2: #{tpu_custom_call.1} parent=1 // pred_check
      _
    $region3: #{tpu_custom_call.1} parent=1 // pred_check_branch
      %14 = sbr.rel (0) target = $region5
    $region4: #{tpu_custom_call.1} parent=1 // pred_region
      %16 = vsyncadd [#allocation3], 0
      %s17 = sshll.u32 %s0, 4
      %s18 = int_to_ptr.hbm [resolvable:$true] %s17
      %s19 = sshll.u32 [#allocation2], 4
      %s20 = int_to_ptr.vmem [resolvable:$true] %s19
      %25 = dma.hbm_to_vmem [thread:$0]  %s18, 128, %s20, [#allocation3], 64, 64, 4
    $region5: #{tpu_custom_call.1} parent=1 // pred_fallthru
      _
    // Predicated region
    $region6: #{tpu_custom_call.1} parent=1 // pred_check
      _
    $region7: #{tpu_custom_call.1} parent=1 // pred_check_branch
      %27 = sbr.rel (0) target = $region9
    $region8: #{tpu_custom_call.1} parent=1 // pred_region
      %29 = vsyncadd [#allocation6], 0
      %s30 = sshll.u32 %s1, 4
      %s31 = int_to_ptr.hbm [resolvable:$true] %s30
      %s32 = sshll.u32 [#allocation5], 4
      %s33 = int_to_ptr.vmem [resolvable:$true] %s32
      %38 = dma.hbm_to_vmem [thread:$0]  %s31, 512, %s33, [#allocation6], 64, 64, 4
    $region9: #{tpu_custom_call.1} parent=1 // pred_fallthru
      _
    // Predicated region
    $region10: #{tpu_custom_call.1} parent=1 // pred_check
      _
    $region11: #{tpu_custom_call.1} parent=1 // pred_check_branch
      %40 = sbr.rel (0) target = $region13
    $region12: #{tpu_custom_call.1} parent=1 // pred_region
      %42 = dma.done [#allocation3], 128
    $region13: #{tpu_custom_call.1} parent=1 // pred_fallthru
      _
    // Predicated region
    $region14: #{tpu_custom_call.1} parent=1 // pred_check
      _
    $region15: #{tpu_custom_call.1} parent=1 // pred_check_branch
      %44 = sbr.rel (0) target = $region17
    $region16: #{tpu_custom_call.1} parent=1 // pred_region
      %46 = dma.done [#allocation6], 512
    $region17: #{tpu_custom_call.1} parent=1 // pred_fallthru
      _
    %v48 = vld [vmem:[#allocation2] sm:$0xf]
    %v49 = vld [vmem:[#allocation2 + $0x4] sm:$0xf]
    %v50 = vld [vmem:[#allocation5] sm:$0xf]
    %v51 = vld [vmem:[#allocation5 + $0x4] sm:$0xf]
    %v52 = vld [vmem:[#allocation5 + $0x8] sm:$0xf]
    %v53 = vld [vmem:[#allocation5 + $0xc] sm:$0xf]
    %v54 = vld [vmem:[#allocation5 + $0x10] sm:$0xf]
    %v55 = vld [vmem:[#allocation5 + $0x14] sm:$0xf]
    %v56 = vld [vmem:[#allocation5 + $0x18] sm:$0xf]
    %v57 = vld [vmem:[#allocation5 + $0x1c] sm:$0xf]
    %v60 = vunpack.c.l.b16 %v48
    %v61 = vunpack.c.l.b16 %v49
    %v62 = vpack.c.b16 %v61, %v60
    %v71 = vunpack.c.l.b16 %v50
    %v72 = vunpack.c.l.b16 %v51
    %v73 = vunpack.c.l.b16 %v52
    %v74 = vunpack.c.l.b16 %v53
    %v75 = vunpack.c.l.b16 %v54
    %v76 = vunpack.c.l.b16 %v55
    %v77 = vunpack.c.l.b16 %v56
    %v78 = vunpack.c.l.b16 %v57
    %v79 = vpack.c.b16 %v72, %v71
    %v80 = vpack.c.b16 %v74, %v73
    %v81 = vpack.c.b16 %v76, %v75
    %v82 = vpack.c.b16 %v78, %v77
    %vm87 = vcmask 523264
    %v89 = vsel %vm87, %v62, 0
    %91 = vmatpush.bf16.msra.mxu0 0
    %92 = vmatpush.bf16.msra.mxu0 0
    %93 = vmatpush.bf16.msra.mxu0 0
    %94 = vmatpush.bf16.msra.mxu0 0
    %95 = vmatpush.bf16.msra.mxu0 %v82
    %96 = vmatpush.bf16.msra.mxu0 %v81
    %97 = vmatpush.bf16.msra.mxu0 %v80
    %98 = vmatpush.bf16.msra.mxu0 %v79
    %99 = vmatmul.bf16.gmra.mxu0 %v89
    %v100 = vpop.f32.mrf.mxu0
    %v101 = vadd.f32 0.0, %v100
    %v102 = vpop.f32.mrf.mxu0
    %v103 = vadd.f32 0.0, %v102
    %104 = vdwg.mxu0
    %v105 = vlaneseq
    %v106 = vand.u32 %v105, 127
    %vm107 = vcmp.lt.s32.totalorder %v106, 4
    %v108 = vsel %vm107, %v101, -1e+30
    %v109 = vsel %vm107, %v103, -1e+30
    %110 = vmax.xlane.f32.xlu0 %v108
    %v111 = vpop.xlane.xlu0 %110
    %112 = vmax.xlane.f32.xlu0 %v109
    %v113 = vpop.xlane.xlu0 %112
    %v114 = vsub.f32 %v108, %v111
    %v115 = vsub.f32 %v109, %v113
    %v116 = vmul.f32 %v114, 1.442695
    %v117 = vpow.pop %v116
    %v118 = vmul.f32 %v115, 1.442695
    %v119 = vpow.pop %v118
    %120 = vadd.xlane.f32.xlu0 %v117
    %v121 = vpop.xlane.xlu0 %120
    %122 = vadd.xlane.f32.xlu0 %v119
    %v123 = vpop.xlane.xlu0 %122
    %v124 = vrcp.pop %v121
    %v125 = vmul.f32 %v121, %v124
    %v126 = vsub.f32 1.0, %v125
    %v127 = vmul.f32 %v124, %v126
    %v128 = vadd.f32 %v124, %v127
    %vm129 = vweird.f32 %v121
    %vm130 = vweird.f32 %v124
    %vm131 = vmor %vm129, %vm130
    %v132 = vsel %vm131, %v124, %v128
    %v133 = vand.u32 2147483647, %v121
    %vm134 = vcmp.eq.f32.partialorder %v133, 8.507059e+37
    %v135 = vand.u32 %v121, 2147483648
    %v136 = vor.u32 1.1754944e-38, %v135
    %v137 = vsel %vm134, %v136, %v132
    %v138 = vmul.f32 %v117, %v137
    %v139 = vrcp.pop %v123
    %v140 = vmul.f32 %v123, %v139
    %v141 = vsub.f32 1.0, %v140
    %v142 = vmul.f32 %v139, %v141
    %v143 = vadd.f32 %v139, %v142
    %vm144 = vweird.f32 %v123
    %vm145 = vweird.f32 %v139
    %vm146 = vmor %vm144, %vm145
    %v147 = vsel %vm146, %v139, %v143
    %v148 = vand.u32 2147483647, %v123
    %vm149 = vcmp.eq.f32.partialorder %v148, 8.507059e+37
    %v150 = vand.u32 %v123, 2147483648
    %v151 = vor.u32 1.1754944e-38, %v150
    %v152 = vsel %vm149, %v151, %v147
    %v153 = vmul.f32 %v119, %v152
    %154 = vmax.xlane.f32.xlu0 %v138
    %v155 = vpop.xlane.xlu0 %154
    %156 = vmax.xlane.f32.xlu0 %v153
    %v157 = vpop.xlane.xlu0 %156
    %vm158 = vcmp.eq.f32.partialorder %v138, %v155
    %vm159 = vcmp.eq.f32.partialorder %v153, %v157
    %v160 = vsel %vm158, %v106, 128
    %v161 = vsel %vm159, %v106, 128
    %v162 = vand.u32 %v160, 65535
    %v163 = vshra.s32 %v160, 16
    %v164 = vcvt.s32.f32 %v162
    %v165 = vcvt.s32.f32 %v163
    %166 = vmin.xlane.f32.xlu0 %v165
    %v167 = vpop.xlane.xlu0 %166
    %vm168 = vcmp.eq.f32.partialorder %v165, %v167
    %v169 = vsel %vm168, %v164, inf
    %170 = vmin.xlane.f32.xlu0 %v169
    %v171 = vpop.xlane.xlu0 %170
    %v172 = vcvt.f32.s32 %v171
    %v173 = vcvt.f32.s32 %v167
    %v174 = vshll.u32 %v173, 16
    %v175 = vadd.s32 %v174, %v172
    %v176 = vand.u32 %v161, 65535
    %v177 = vshra.s32 %v161, 16
    %v178 = vcvt.s32.f32 %v176
    %v179 = vcvt.s32.f32 %v177
    %180 = vmin.xlane.f32.xlu0 %v179
    %v181 = vpop.xlane.xlu0 %180
    %vm182 = vcmp.eq.f32.partialorder %v179, %v181
    %v183 = vsel %vm182, %v178, inf
    %184 = vmin.xlane.f32.xlu0 %v183
    %v185 = vpop.xlane.xlu0 %184
    %v186 = vcvt.f32.s32 %v185
    %v187 = vcvt.f32.s32 %v181
    %v188 = vshll.u32 %v187, 16
    %v189 = vadd.s32 %v188, %v186
    %vm190 = vcmask 7168
    %191 = vst.msk [vmem:[%s2] sm:$0xff] %vm190, %v175
    %192 = vst.msk [vmem:[%s2 + $0x8] sm:$0xff] %vm190, %v189
    %193 = vst.msk [vmem:[%s3] sm:$0xff] %vm190, %v155
    %194 = vst.msk [vmem:[%s3 + $0x8] sm:$0xff] %vm190, %v157
    %s195 = smul.u32 0, 16
    %v196 = vlaneseq
    %v197 = vshrl.u32 %v196, 7
    %v198 = vadd.s32 %v197, 8
    %v199 = vstv %s195
    %v200 = vadd.s32 %v199, %v197
    %v201 = vadd.s32 %v199, %v198
    %vm202 = vcmp.lt.s32.totalorder %v200, 16
    %vm203 = vcmp.lt.s32.totalorder %v201, 16
    %v204 = vsel %vm202, 1, 0
    %v205 = vsel %vm203, 1, 0
    %vm206 = vcmp.eq.s32.totalorder %v204, 1
    %vm207 = vcmp.eq.s32.totalorder %v205, 1
    %v208 = vsel %vm206, %v138, 0.0
    %v209 = vsel %vm207, %v153, 0.0
    %v210 = vadd.f32 %v208, %v209
    %v211 = vrot.slane %v210, 4
    %v212 = vadd.f32 %v210, %v211
    %v213 = vrot.slane %v212, 2
    %v214 = vadd.f32 %v212, %v213
    %v215 = vrot.slane %v214, 1
    %v216 = vadd.f32 %v214, %v215
    %217 = vst [vmem:[#allocation7] sm:$0x1] %v216
    // Predicated region
    $region18: #{tpu_custom_call.1} parent=1 // pred_check
      _
    $region19: #{tpu_custom_call.1} parent=1 // pred_check_branch
      %219 = sbr.rel (0) target = $region21
    $region20: #{tpu_custom_call.1} parent=1 // pred_region
      _
    $region21: #{tpu_custom_call.1} parent=1 // pred_fallthru
      _
    // Predicated region
    $region22: #{tpu_custom_call.1} parent=1 // pred_check
      _
    $region23: #{tpu_custom_call.1} parent=1 // pred_check_branch
      %221 = sbr.rel (0) target = $region25
    $region24: #{tpu_custom_call.1} parent=1 // pred_region
      _
    $region25: #{tpu_custom_call.1} parent=1 // pred_fallthru
      _
    // Predicated region
    $region26: #{tpu_custom_call.1} parent=1 // pred_check
      _
    $region27: #{tpu_custom_call.1} parent=1 // pred_check_branch
      %223 = sbr.rel (0) target = $region29
    $region28: #{tpu_custom_call.1} parent=1 // pred_region
      %225 = vsyncadd [#allocation4], 0
      %s227 = sshll.u32 [#allocation7], 4
      %s228 = int_to_ptr.vmem [resolvable:$true] %s227
      %s229 = sshll.u32 %s4, 4
      %s230 = int_to_ptr.hbm [resolvable:$true] %s229
      %232 = dma.vmem_to_hbm [thread:$0]  %s228, 16, %s230, [#allocation4]
    $region29: #{tpu_custom_call.1} parent=1 // pred_fallthru
      _
    // Predicated region
    $region30: #{tpu_custom_call.1} parent=1 // pred_check
      _
    $region31: #{tpu_custom_call.1} parent=1 // pred_check_branch
      %234 = sbr.rel (0) target = $region33
    $region32: #{tpu_custom_call.1} parent=1 // pred_region
      _
    $region33: #{tpu_custom_call.1} parent=1 // pred_fallthru
      _
    // Predicated region
    $region34: #{tpu_custom_call.1} parent=1 // pred_check
      _
    $region35: #{tpu_custom_call.1} parent=1 // pred_check_branch
      %236 = sbr.rel (0) target = $region37
    $region36: #{tpu_custom_call.1} parent=1 // pred_region
      _
    $region37: #{tpu_custom_call.1} parent=1 // pred_fallthru
      _
    // Predicated region
    $region38: #{tpu_custom_call.1} parent=1 // pred_check
      _
    $region39: #{tpu_custom_call.1} parent=1 // pred_check_branch
      %238 = sbr.rel (0) target = $region41
    $region40: #{tpu_custom_call.1} parent=1 // pred_region
      %240 = dma.done [#allocation4], 16
    $region41: #{tpu_custom_call.1} parent=1 // pred_fallthru
      _
    %241 = vsyncpa [#allocation3], 1
    %242 = vsyncpa [#allocation6], 1
    %243 = vsyncpa [#allocation4], 1

</llo_original>
